<compile_context>
chip_gen: v5e
topology: v5e:2x2
jax: 0.10.0
libtpu: 0.0.40
codegen_flags: <defaults>
</compile_context>

<pallas_src>
import jax
import jax.numpy as jnp
from jax.experimental import pallas as pl
from jax.experimental.pallas import tpu as pltpu


# ---------------------------------------------------------------------------
# Kernel body: write one copy of v1 = [x1 ; x2] into the output block.
# ---------------------------------------------------------------------------
def _cat_repeat_kernel(x1_ref, x2_ref, out_ref):
    # Block shapes:
    #   x1_ref : (bt, S1, dt)
    #   x2_ref : (bt, S2, dt)     (resident across the innermost repeat axis)
    #   out_ref: (bt, S1+S2, dt)  -> the half of the duplicated output selected
    #                                by the repeat grid index.
    s1 = x1_ref.shape[1]
    out_ref[:, :s1, :] = x1_ref[...]
    out_ref[:, s1:, :] = x2_ref[...]


# ---------------------------------------------------------------------------
# Tiling helpers
# ---------------------------------------------------------------------------
def _divisors_desc(n):
    return [d for d in range(n, 0, -1) if n % d == 0]


def _sublane_multiple(dtype):
    # 8 for f32, 16 for bf16, 32 for int8 — native sublane packing.
    return max(1, 32 // jnp.dtype(dtype).itemsize)


def _pick_tiles(B, S, D, itemsize, *,
                block_budget=2 << 20,    # per-block bytes; ~4x this is resident
                min_block=512 << 10,     # keep HBM transfers efficient
                min_steps=8):            # enough grid steps to pipeline
    """Pick (batch_tile, feature_tile) for blocks of shape (bt, S, dt)."""
    # --- D tile: lane-aligned (multiple of 128) divisor of D, only if needed ---
    dt = D
    if S * D * itemsize > block_budget and D % 128 == 0:
        dt = 128
        for mult in _divisors_desc(D // 128):
            cand = mult * 128
            if S * cand * itemsize <= block_budget:
                dt = cand
                break

    # --- batch tile: largest divisor of B that fits the budget ---
    bt = 1
    for cand in _divisors_desc(B):
        if cand * S * dt * itemsize <= block_budget:
            bt = cand
            break

    # --- shrink bt for pipelining, but keep blocks >= min_block ---
    def n_steps(b):
        return (B // b) * (D // dt) * 2

    chosen = bt
    for cand in _divisors_desc(bt):
        if cand * S * dt * itemsize < min_block:
            break
        chosen = cand
        if n_steps(cand) >= min_steps:
            break
    return chosen, dt


# ---------------------------------------------------------------------------
# Wrapper
# ---------------------------------------------------------------------------
def cat_slice_cat(x1, x2, *, use_pallas=None):
    """v4 = cat([cat([x1, x2], 1), cat([x1, x2], 1)], 1)."""
    B, S1, D = x1.shape
    Bb, S2, Dd = x2.shape
    if B != Bb or D != Dd:
        raise ValueError("cat along dim=1 requires matching batch & feature dims")
    if x1.dtype != x2.dtype:
        raise ValueError("dtype mismatch: cat dtype promotion not implemented")

    S = S1 + S2
    itemsize = jnp.dtype(x1.dtype).itemsize
    sub = _sublane_multiple(x1.dtype)
    total_in_bytes = B * S * D * itemsize

    bt, dt = _pick_tiles(B, S, D, itemsize)
    block_bytes = bt * S * dt * itemsize
    # Output block's 2nd-to-last dim is S (a partial window of the 2S axis), so
    # it must be a sublane multiple for lowering. 4x block_bytes is the real
    # double-buffered residency (inputs + output), keep it well inside scoped
    # VMEM on every generation (v5e 16 MiB default, v7x 32 MiB default).
    pallas_ok = (S % sub == 0) and (4 * block_bytes <= (12 << 20))

    if use_pallas is None:
        # Tiny inputs are dominated by launch / per-step overhead: let XLA do it.
        use_pallas = pallas_ok and total_in_bytes >= (1 << 20)
    if use_pallas and not pallas_ok:
        raise ValueError(
            f"Pallas path unsupported for this shape: S={S} (needs multiple of "
            f"{sub}), block_bytes={block_bytes}")

    if not use_pallas:
        v1 = jnp.concatenate([x1, x2], axis=1)
        return jnp.concatenate([v1, v1], axis=1)

    grid = (B // bt, D // dt, 2)  # (batch tiles, feature tiles, repeat-of-concat)

    # Megacore gating: when there are >= 2 independent (b, d) tiles, shard those
    # across TensorCores and keep the repeat axis "arbitrary" so the constant
    # input index_maps mean x1/x2 are fetched exactly once per tile. Only a
    # degenerate grid keeps r "parallel" so both cores still participate.
    if grid[0] * grid[1] >= 2:
        dim_sem = ("parallel", "parallel", "arbitrary")
    else:
        dim_sem = ("parallel", "parallel", "parallel")

    out_shape = jax.ShapeDtypeStruct((B, 2 * S, D), x1.dtype)

    return pl.pallas_call(
        _cat_repeat_kernel,
        out_shape=out_shape,
        grid_spec=pltpu.PrefetchScalarGridSpec(
            num_scalar_prefetch=0,
            grid=grid,
            in_specs=[
                # Constant block index along r (innermost) -> inputs stay
                # resident in VMEM across the repeat axis (1 fetch, 2 writes).
                pl.BlockSpec((bt, S1, dt), lambda b, d, r: (b, 0, d)),
                pl.BlockSpec((bt, S2, dt), lambda b, d, r: (b, 0, d)),
            ],
            # r selects which half of the duplicated output this step fills.
            out_specs=pl.BlockSpec((bt, S, dt), lambda b, d, r: (b, r, d)),
        ),
        compiler_params=pltpu.CompilerParams(dimension_semantics=dim_sem),
        cost_estimate=pl.CostEstimate(
            flops=0, transcendentals=0, bytes_accessed=3 * total_in_bytes),
    )(x1, x2)


def model_forward(x1, x2, x3, x4, x5):
    """Mirrors Model.forward.

    v2 (off-by-one slice) is dead, v3 (full slice) is identity in the original
    module; v6-v8 are undefined there (would raise NameError), so only the
    concat result and the v5 passthrough are returned.
    """
    v4 = cat_slice_cat(x1, x2)
    return v4, x5


if __name__ == "__main__":
    key = jax.random.PRNGKey(0)
    k1, k2, k3, k4, k5 = jax.random.split(key, 5)

    # Small shapes consistent with cat along dim=1 (batch & feature dims match).
    # S1, S1+S2 multiples of 8 keep f32 sublane tiles aligned at the concat seam.
    B, S1, S2, D = 8, 24, 8, 256
    x1 = jax.random.normal(k1, (B, S1, D), dtype=jnp.float32)
    x2 = jax.random.normal(k2, (B, S2, D), dtype=jnp.float32)
    x3 = jax.random.normal(k3, (B, S1, D), dtype=jnp.float32)  # unused by forward
    x4 = jax.random.normal(k4, (B, S1, D), dtype=jnp.float32)  # unused by forward
    x5 = jax.random.normal(k5, (B, S1, D), dtype=jnp.float32)  # returned as-is

    # Reference in plain JAX.
    v1_ref = jnp.concatenate([x1, x2], axis=1)
    v4_ref = jnp.concatenate([v1_ref, v1_ref], axis=1)

    # Explicitly exercise the Pallas path (the auto path would size-gate these
    # tiny harness shapes to the XLA fast path).
    v4_pallas = jax.block_until_ready(cat_slice_cat(x1, x2, use_pallas=True))
    assert v4_pallas.shape == (B, 2 * (S1 + S2), D), v4_pallas.shape
    assert jnp.array_equal(v4_pallas, v4_ref), "Pallas path mismatch vs reference"

    # Full forward (auto-gated path) + passthrough check.
    v4, v5 = model_forward(x1, x2, x3, x4, x5)
    v4 = jax.block_until_ready(v4)
    v5 = jax.block_until_ready(v5)
    assert jnp.array_equal(v4, v4_ref), "forward mismatch vs reference"
    assert jnp.array_equal(v5, x5), "v5 passthrough mismatch"

    print("KERNEL_OK")
</pallas_src>

<mosaic_0001>
module attributes {stable_mosaic.version = 11 : i64} {
  func.func @_cat_repeat_kernel(%arg0: i32, %arg1: i32, %arg2: i32, %arg3: memref<8x24x256xf32, #tpu.memory_space<vmem>>, %arg4: memref<8x8x256xf32, #tpu.memory_space<vmem>>, %arg5: memref<8x32x256xf32, #tpu.memory_space<vmem>>) attributes {dimension_semantics = [#tpu.dimension_semantics<parallel>, #tpu.dimension_semantics<parallel>, #tpu.dimension_semantics<parallel>], iteration_bounds = array<i64: 1, 1, 2>, scalar_prefetch = 0 : i64, scratch_operands = 0 : i64, tpu.core_type = #tpu.core_type<tc>, window_params = [{transform_indices = @transform_0, window_bounds = array<i64: 8, 24, 256>}, {transform_indices = @transform_1, window_bounds = array<i64: 8, 8, 256>}, {transform_indices = @transform_2, window_bounds = array<i64: 8, 32, 256>}]} {
    %c0 = arith.constant 0 : index
    %c0_0 = arith.constant 0 : index
    %c0_1 = arith.constant 0 : index
    %0 = vector.load %arg3[%c0, %c0_0, %c0_1] : memref<8x24x256xf32, #tpu.memory_space<vmem>>, vector<8x24x256xf32>
    %c0_2 = arith.constant 0 : index
    %c0_3 = arith.constant 0 : index
    %c0_4 = arith.constant 0 : index
    %1 = vector.load %arg5[%c0_2, %c0_3, %c0_4] : memref<8x32x256xf32, #tpu.memory_space<vmem>>, vector<8x24x256xf32>
    tpu.vector_store %arg5[%c0_2, %c0_3, %c0_4], %0 {strides = array<i32>} : memref<8x32x256xf32, #tpu.memory_space<vmem>>, vector<8x24x256xf32>,
    %c0_5 = arith.constant 0 : index
    %c0_6 = arith.constant 0 : index
    %c0_7 = arith.constant 0 : index
    %2 = vector.load %arg4[%c0_5, %c0_6, %c0_7] : memref<8x8x256xf32, #tpu.memory_space<vmem>>, vector<8x8x256xf32>
    %c0_8 = arith.constant 0 : index
    %c24 = arith.constant 24 : index
    %c0_9 = arith.constant 0 : index
    %3 = vector.load %arg5[%c0_8, %c24, %c0_9] : memref<8x32x256xf32, #tpu.memory_space<vmem>>, vector<8x8x256xf32>
    tpu.vector_store %arg5[%c0_8, %c24, %c0_9], %2 {strides = array<i32>} : memref<8x32x256xf32, #tpu.memory_space<vmem>>, vector<8x8x256xf32>,
    return
  }
  func.func @transform_0(%arg0: i32, %arg1: i32, %arg2: i32) -> (i32, i32, i32) {
    %c0_i32 = arith.constant 0 : i32
    %c0_i32_0 = arith.constant 0 : i32
    return %arg0, %c0_i32, %arg1 : i32, i32, i32
  }
  func.func @transform_1(%arg0: i32, %arg1: i32, %arg2: i32) -> (i32, i32, i32) {
    %c0_i32 = arith.constant 0 : i32
    %c0_i32_0 = arith.constant 0 : i32
    return %arg0, %c0_i32, %arg1 : i32, i32, i32
  }
  func.func @transform_2(%arg0: i32, %arg1: i32, %arg2: i32) -> (i32, i32, i32) {
    %c0_i32 = arith.constant 0 : i32
    return %arg0, %arg2, %arg1 : i32, i32, i32
  }
}

</mosaic_0001>

<llo_original>
// kernel: tpu_custom_call.1
$region0: #{tpu_custom_call.1}
  #allocation0 [shape = 'u32[]', space=smem, size = 0x4, offset = 0x4, fixed_abs, tag = 'smem constant byte address 0x4 - core index']
  #allocation1 [shape = 'u32[72,128]{1,0:T(1,128)}', space=vmem, size = 0x9000, scoped, tag = 'internal scratch']
  #allocation8 [shape = 's32[]', space=sflag, size = 0x4, offset = 0, fixed_abs, tag = 'sflag constant byte address 0x0 - dummy sync flag']
  %s0 = inlined_call_operand.hbm [shape: f32[8,24,256], index: 0, kind: input, shape index: {}]
  %s1 = inlined_call_operand.hbm [shape: f32[8,8,256], index: 1, kind: input, shape index: {}]
  %s2 = inlined_call_operand.hbm [shape: f32[8,64,256], index: 2, kind: output, shape index: {}]
  %s3 = sld [smem:[#allocation0]]
  $region49: #{tpu_custom_call.1} parent=0
    _
  %s5 = ssub.s32 1, %s3
  %s6 = scalar_select 0, %s5, %s3
  $region1: #{tpu_custom_call.1} parent=0
    #allocation2 [shape = 'u8[196608]{0}', space=vmem, size = 0x30000, scoped, tag = 'input window, operand 0, single buffered']
    #allocation3 [shape = 's32[2]{0}', space=sflag, size = 0x8, scoped, tag = 'scoped memory for tpu_custom_call.1']
    #allocation4 [shape = 's32[2]{0}', space=sflag, size = 0x8, scoped, tag = 'scoped memory for tpu_custom_call.1']
    #allocation5 [shape = 'u8[65536]{0}', space=vmem, size = 0x10000, scoped, tag = 'input window, operand 1, single buffered']
    #allocation6 [shape = 's32[1]{0}', space=sflag, size = 0x4, scoped, tag = 'scoped memory for tpu_custom_call.1']
    #allocation7 [shape = 'u8[524288]{0}', space=vmem, size = 0x80000, scoped, tag = 'output window, operand 0']
    %7 = vsyncpa [#allocation3], 0
    %8 = vsyncpa [#allocation6], 0
    %9 = vsyncpa [#allocation4], 0
    %s10 = scalar_lea.sflag [#allocation4], 1
    %11 = vsyncpa %s10, 0
    loop: start=0, step=1, limit=4
    $region2: #{tpu_custom_call.1} parent=1 // loop_pre_header
      _
    $region3: #{tpu_custom_call.1} parent=1 // loop_header
      %s13 = sphi 0, %s17
      %p14 = scmp.ge.s32.totalorder %s13, 4
      %s20 = sphi 0, %s39
      %s21 = sphi 0, %s35
      %s22 = sphi 0, %s31
      %s23 = sphi 0, %s20
      %s24 = sphi 0, %s21
      %s25 = sphi 0, %s22
      %s26 = sphi 0, %s23
      %s27 = sphi 0, %s24
      %s28 = sphi 0, %s25
      %s44 = sphi 0, %s46
      %s47 = sphi 0, %s44
      %s48 = sphi 0, %s47
      %s64 = sphi 0, %s48
      %s72 = sphi 0, %s74
      %s75 = sphi 0, %s72
      %s76 = sphi 0, %s75
      %s92 = sphi 0, %s76
      %s102 = sphi 0, %s104
      %s105 = sphi 0, %s102
      %s106 = sphi 0, %s105
      %s122 = sphi 0, %s106
    $region4: #{tpu_custom_call.1} parent=1 // loop_header_branch
      %16 = sbr.rel (%p14) target = $region8
    $region5: #{tpu_custom_call.1} parent=1 // loop_body
      %s18 = ssub.s32 %s13, 1
      %s19 = ssub.s32 %s13, 2
      %s29 = sadd.s32 1, %s22
      %p30 = scmp.ge.s32.totalorder %s29, 2
      %s31 = scalar_select %p30, 0, %s29
      %s32 = sadd.s32 1, %s21
      %s33 = scalar_select %p30, %s32, %s21
      %p34 = scmp.ge.s32.totalorder %s33, 1
      %s35 = scalar_select %p34, 0, %s33
      %s36 = sadd.s32 1, %s20
      %s37 = scalar_select %p34, %s36, %s20
      %p38 = scmp.ge.s32.totalorder %s37, 1
      %s39 = scalar_select %p38, 0, %s37
      %s40 = ssub.s32 %s20, %s39
      %s41 = ssub.s32 %s21, %s35
      %s42 = sor.u32 %s40, %s41
      %p43 = scmp.eq.s32.totalorder %s42, 0
      %s45 = sadd.s32 %s44, 1
      %s46 = scalar_select %p43, %s44, %s45
      %p49 = pneg %p43
      %p50 = scmp.eq.s32.totalorder %s13, 1
      %p51 = por %p49, %p50
      %p52 = scmp.ne.s32.totalorder %s44, %s47
      %p53 = scmp.eq.s32.totalorder %s13, 0
      %p54 = por %p52, %p53
      %p55 = scmp.ne.s32.totalorder %s44, %s47
      %p56 = scmp.eq.s32.totalorder %s18, 1
      %p57 = por %p55, %p56
      %p58 = scmp.ne.s32.totalorder %s47, %s48
      %p59 = scmp.eq.s32.totalorder %s18, 0
      %p60 = por %p58, %p59
      %p61 = scmp.ne.s32.totalorder %s47, %s48
      %p62 = scmp.eq.s32.totalorder %s19, 1
      %p63 = por %p61, %p62
      %p65 = scmp.ne.s32.totalorder %s48, %s64
      %p66 = scmp.eq.s32.totalorder %s19, 0
      %p67 = por %p65, %p66
      %s68 = ssub.s32 %s20, %s39
      %s69 = ssub.s32 %s21, %s35
      %s70 = sor.u32 %s68, %s69
      %p71 = scmp.eq.s32.totalorder %s70, 0
      %s73 = sadd.s32 %s72, 1
      %s74 = scalar_select %p71, %s72, %s73
      %p77 = pneg %p71
      %p78 = scmp.eq.s32.totalorder %s13, 1
      %p79 = por %p77, %p78
      %p80 = scmp.ne.s32.totalorder %s72, %s75
      %p81 = scmp.eq.s32.totalorder %s13, 0
      %p82 = por %p80, %p81
      %p83 = scmp.ne.s32.totalorder %s72, %s75
      %p84 = scmp.eq.s32.totalorder %s18, 1
      %p85 = por %p83, %p84
      %p86 = scmp.ne.s32.totalorder %s75, %s76
      %p87 = scmp.eq.s32.totalorder %s18, 0
      %p88 = por %p86, %p87
      %p89 = scmp.ne.s32.totalorder %s75, %s76
      %p90 = scmp.eq.s32.totalorder %s19, 1
      %p91 = por %p89, %p90
      %p93 = scmp.ne.s32.totalorder %s76, %s92
      %p94 = scmp.eq.s32.totalorder %s19, 0
      %p95 = por %p93, %p94
      %s96 = ssub.s32 %s20, %s39
      %s97 = ssub.s32 %s22, %s31
      %s98 = sor.u32 %s96, %s97
      %s99 = ssub.s32 %s21, %s35
      %s100 = sor.u32 %s98, %s99
      %p101 = scmp.eq.s32.totalorder %s100, 0
      %s103 = sadd.s32 %s102, 1
      %s104 = scalar_select %p101, %s102, %s103
      %p107 = pneg %p101
      %p108 = scmp.eq.s32.totalorder %s13, 1
      %p109 = por %p107, %p108
      %p110 = scmp.ne.s32.totalorder %s102, %s105
      %p111 = scmp.eq.s32.totalorder %s13, 0
      %p112 = por %p110, %p111
      %p113 = scmp.ne.s32.totalorder %s102, %s105
      %p114 = scmp.eq.s32.totalorder %s18, 1
      %p115 = por %p113, %p114
      %p116 = scmp.ne.s32.totalorder %s105, %s106
      %p117 = scmp.eq.s32.totalorder %s18, 0
      %p118 = por %p116, %p117
      %p119 = scmp.ne.s32.totalorder %s105, %s106
      %p120 = scmp.eq.s32.totalorder %s19, 1
      %p121 = por %p119, %p120
      %p123 = scmp.ne.s32.totalorder %s106, %s122
      %p124 = scmp.eq.s32.totalorder %s19, 0
      %p125 = por %p123, %p124
      %p126 = scmp.le.s32.totalorder 1, %s13
      %p127 = scmp.lt.s32.totalorder %s13, 3
      %p128 = pnand %p126, %p127
      %p129 = pneg %p128
      // Predicated region
      $region9: #{tpu_custom_call.1} parent=5 // pred_check
        _
      $region10: #{tpu_custom_call.1} parent=5 // pred_check_branch
        %131 = sbr.rel (%p128) target = $region12
      $region11: #{tpu_custom_call.1} parent=5 // pred_region
        %s132 = ssub.s32 %s13, 1
        // Predicated region
        $region13: #{tpu_custom_call.1} parent=11 // pred_check
          %p133 = pneg %p60
        $region14: #{tpu_custom_call.1} parent=11 // pred_check_branch
          %135 = sbr.rel (%p133) target = $region16
        $region15: #{tpu_custom_call.1} parent=11 // pred_region
          %s136 = smul.u32 8, %s23
          %s137 = smul.u32 2, %s24
          %139 = vsyncadd [#allocation3], 0
          %s140 = smul.addr %s136, 6
          %s141 = sadd.s32 %s137, %s140
          %s142 = smul.addr %s141, 8
          %s143 = scalar_lea.hbm %s0, %s142
          %s144 = sshll.u32 %s143, 4
          %s145 = int_to_ptr.hbm [resolvable:$true] %s144
          %s146 = sshll.u32 [#allocation2], 4
          %s147 = int_to_ptr.vmem [resolvable:$true] %s146
          %152 = dma.hbm_to_vmem [thread:$0]  %s145, 6144, %s147, [#allocation3], 256, 256, 16
        $region16: #{tpu_custom_call.1} parent=11 // pred_fallthru
          _
        // Predicated region
        $region17: #{tpu_custom_call.1} parent=11 // pred_check
          %p153 = pneg %p88
        $region18: #{tpu_custom_call.1} parent=11 // pred_check_branch
          %155 = sbr.rel (%p153) target = $region20
        $region19: #{tpu_custom_call.1} parent=11 // pred_region
          %s156 = smul.u32 8, %s23
          %s157 = smul.u32 2, %s24
          %159 = vsyncadd [#allocation6], 0
          %s160 = smul.addr %s156, 2
          %s161 = sadd.s32 %s157, %s160
          %s162 = smul.addr %s161, 8
          %s163 = scalar_lea.hbm %s1, %s162
          %s164 = sshll.u32 %s163, 4
          %s165 = int_to_ptr.hbm [resolvable:$true] %s164
          %s166 = sshll.u32 [#allocation5], 4
          %s167 = int_to_ptr.vmem [resolvable:$true] %s166
          %172 = dma.hbm_to_vmem [thread:$0]  %s165, 2048, %s167, [#allocation6], 256, 256, 16
        $region20: #{tpu_custom_call.1} parent=11 // pred_fallthru
          _
      $region12: #{tpu_custom_call.1} parent=5 // pred_fallthru
        _
      %p173 = scmp.lt.s32.totalorder %s13, 2
      // Predicated region
      $region21: #{tpu_custom_call.1} parent=5 // pred_check
        %p174 = pneg %p173
      $region22: #{tpu_custom_call.1} parent=5 // pred_check_branch
        %176 = sbr.rel (%p174) target = $region24
      $region23: #{tpu_custom_call.1} parent=5 // pred_region
        _
      $region24: #{tpu_custom_call.1} parent=5 // pred_fallthru
        _
      %p177 = scmp.le.s32.totalorder 1, %s13
      %p178 = scmp.lt.s32.totalorder %s13, 3
      %p179 = pnand %p177, %p178
      %p180 = pneg %p179
      // Predicated region
      $region25: #{tpu_custom_call.1} parent=5 // pred_check
        _
      $region26: #{tpu_custom_call.1} parent=5 // pred_check_branch
        %182 = sbr.rel (%p179) target = $region28
      $region27: #{tpu_custom_call.1} parent=5 // pred_region
        %s183 = ssub.s32 %s13, 1
        // Predicated region
        $region29: #{tpu_custom_call.1} parent=27 // pred_check
          %p184 = pneg %p60
        $region30: #{tpu_custom_call.1} parent=27 // pred_check_branch
          %186 = sbr.rel (%p184) target = $region32
        $region31: #{tpu_custom_call.1} parent=27 // pred_region
          %188 = dma.done [#allocation3], 6144
        $region32: #{tpu_custom_call.1} parent=27 // pred_fallthru
          _
        // Predicated region
        $region33: #{tpu_custom_call.1} parent=27 // pred_check
          %p189 = pneg %p88
        $region34: #{tpu_custom_call.1} parent=27 // pred_check_branch
          %191 = sbr.rel (%p189) target = $region36
        $region35: #{tpu_custom_call.1} parent=27 // pred_region
          %193 = dma.done [#allocation6], 2048
        $region36: #{tpu_custom_call.1} parent=27 // pred_fallthru
          _
        %p194 = pneg %p60
        %p195 = pneg %p57
        %p196 = pneg %p88
        %p197 = pneg %p85
        %p198 = pneg %p118
        %p199 = pneg %p115
        %s200 = sand.u32 %s105, 1
        %s201 = scalar_lea.sflag [#allocation4], %s200
        %s202 = sand.u32 %s105, 1
        %s203 = smul.addr %s202, 512
        %s204 = scalar_lea.vmem [#allocation7], %s203
        %s205 = smul.u32 8, %s23
        %s206 = smul.u32 2, %s24
        %s207 = smul.u32 8, %s23
        %s208 = smul.u32 2, %s24
        %s209 = smul.u32 8, %s23
        %s210 = smul.u32 4, %s25
        %s211 = smul.u32 2, %s24
        %v212 = vld [vmem:[#allocation2] sm:$0xff]
        %v213 = vld [vmem:[#allocation2 + $0x8] sm:$0xff]
        %v214 = vld [vmem:[#allocation2 + $0x10] sm:$0xff]
        %v215 = vld [vmem:[#allocation2 + $0x18] sm:$0xff]
        %v216 = vld [vmem:[#allocation2 + $0x20] sm:$0xff]
        %v217 = vld [vmem:[#allocation2 + $0x28] sm:$0xff]
        %v218 = vld [vmem:[#allocation2 + $0x30] sm:$0xff]
        %v219 = vld [vmem:[#allocation2 + $0x38] sm:$0xff]
        %v220 = vld [vmem:[#allocation2 + $0x40] sm:$0xff]
        %v221 = vld [vmem:[#allocation2 + $0x48] sm:$0xff]
        %v222 = vld [vmem:[#allocation2 + $0x50] sm:$0xff]
        %v223 = vld [vmem:[#allocation2 + $0x58] sm:$0xff]
        %v224 = vld [vmem:[#allocation2 + $0x60] sm:$0xff]
        %v225 = vld [vmem:[#allocation2 + $0x68] sm:$0xff]
        %v226 = vld [vmem:[#allocation2 + $0x70] sm:$0xff]
        %v227 = vld [vmem:[#allocation2 + $0x78] sm:$0xff]
        %v228 = vld [vmem:[#allocation2 + $0x80] sm:$0xff]
        %v229 = vld [vmem:[#allocation2 + $0x88] sm:$0xff]
        %v230 = vld [vmem:[#allocation2 + $0x90] sm:$0xff]
        %v231 = vld [vmem:[#allocation2 + $0x98] sm:$0xff]
        %v232 = vld [vmem:[#allocation2 + $0xa0] sm:$0xff]
        %v233 = vld [vmem:[#allocation2 + $0xa8] sm:$0xff]
        %v234 = vld [vmem:[#allocation2 + $0xb0] sm:$0xff]
        %v235 = vld [vmem:[#allocation2 + $0xb8] sm:$0xff]
        %v236 = vld [vmem:[#allocation2 + $0xc0] sm:$0xff]
        %v237 = vld [vmem:[#allocation2 + $0xc8] sm:$0xff]
        %v238 = vld [vmem:[#allocation2 + $0xd0] sm:$0xff]
        %v239 = vld [vmem:[#allocation2 + $0xd8] sm:$0xff]
        %v240 = vld [vmem:[#allocation2 + $0xe0] sm:$0xff]
        %v241 = vld [vmem:[#allocation2 + $0xe8] sm:$0xff]
        %v242 = vld [vmem:[#allocation2 + $0xf0] sm:$0xff]
        %v243 = vld [vmem:[#allocation2 + $0xf8] sm:$0xff]
        %v244 = vld [vmem:[#allocation2 + $0x100] sm:$0xff]
        %v245 = vld [vmem:[#allocation2 + $0x108] sm:$0xff]
        %v246 = vld [vmem:[#allocation2 + $0x110] sm:$0xff]
        %v247 = vld [vmem:[#allocation2 + $0x118] sm:$0xff]
        %v248 = vld [vmem:[#allocation2 + $0x120] sm:$0xff]
        %v249 = vld [vmem:[#allocation2 + $0x128] sm:$0xff]
        %v250 = vld [vmem:[#allocation2 + $0x130] sm:$0xff]
        %v251 = vld [vmem:[#allocation2 + $0x138] sm:$0xff]
        %v252 = vld [vmem:[#allocation2 + $0x140] sm:$0xff]
        %v253 = vld [vmem:[#allocation2 + $0x148] sm:$0xff]
        %v254 = vld [vmem:[#allocation2 + $0x150] sm:$0xff]
        %v255 = vld [vmem:[#allocation2 + $0x158] sm:$0xff]
        %v256 = vld [vmem:[#allocation2 + $0x160] sm:$0xff]
        %v257 = vld [vmem:[#allocation2 + $0x168] sm:$0xff]
        %v258 = vld [vmem:[#allocation2 + $0x170] sm:$0xff]
        %v259 = vld [vmem:[#allocation2 + $0x178] sm:$0xff]
        %260 = vst [vmem:[%s204] sm:$0xff] %v212
        %261 = vst [vmem:[%s204 + $0x8] sm:$0xff] %v213
        %262 = vst [vmem:[%s204 + $0x10] sm:$0xff] %v214
        %263 = vst [vmem:[%s204 + $0x18] sm:$0xff] %v215
        %264 = vst [vmem:[%s204 + $0x20] sm:$0xff] %v216
        %265 = vst [vmem:[%s204 + $0x28] sm:$0xff] %v217
        %266 = vst [vmem:[%s204 + $0x40] sm:$0xff] %v218
        %267 = vst [vmem:[%s204 + $0x48] sm:$0xff] %v219
        %268 = vst [vmem:[%s204 + $0x50] sm:$0xff] %v220
        %269 = vst [vmem:[%s204 + $0x58] sm:$0xff] %v221
        %270 = vst [vmem:[%s204 + $0x60] sm:$0xff] %v222
        %271 = vst [vmem:[%s204 + $0x68] sm:$0xff] %v223
        %272 = vst [vmem:[%s204 + $0x80] sm:$0xff] %v224
        %273 = vst [vmem:[%s204 + $0x88] sm:$0xff] %v225
        %274 = vst [vmem:[%s204 + $0x90] sm:$0xff] %v226
        %275 = vst [vmem:[%s204 + $0x98] sm:$0xff] %v227
        %276 = vst [vmem:[%s204 + $0xa0] sm:$0xff] %v228
        %277 = vst [vmem:[%s204 + $0xa8] sm:$0xff] %v229
        %278 = vst [vmem:[%s204 + $0xc0] sm:$0xff] %v230
        %279 = vst [vmem:[%s204 + $0xc8] sm:$0xff] %v231
        %280 = vst [vmem:[%s204 + $0xd0] sm:$0xff] %v232
        %281 = vst [vmem:[%s204 + $0xd8] sm:$0xff] %v233
        %282 = vst [vmem:[%s204 + $0xe0] sm:$0xff] %v234
        %283 = vst [vmem:[%s204 + $0xe8] sm:$0xff] %v235
        %284 = vst [vmem:[%s204 + $0x100] sm:$0xff] %v236
        %285 = vst [vmem:[%s204 + $0x108] sm:$0xff] %v237
        %286 = vst [vmem:[%s204 + $0x110] sm:$0xff] %v238
        %287 = vst [vmem:[%s204 + $0x118] sm:$0xff] %v239
        %288 = vst [vmem:[%s204 + $0x120] sm:$0xff] %v240
        %289 = vst [vmem:[%s204 + $0x128] sm:$0xff] %v241
        %290 = vst [vmem:[%s204 + $0x140] sm:$0xff] %v242
        %291 = vst [vmem:[%s204 + $0x148] sm:$0xff] %v243
        %292 = vst [vmem:[%s204 + $0x150] sm:$0xff] %v244
        %293 = vst [vmem:[%s204 + $0x158] sm:$0xff] %v245
        %294 = vst [vmem:[%s204 + $0x160] sm:$0xff] %v246
        %295 = vst [vmem:[%s204 + $0x168] sm:$0xff] %v247
        %296 = vst [vmem:[%s204 + $0x180] sm:$0xff] %v248
        %297 = vst [vmem:[%s204 + $0x188] sm:$0xff] %v249
        %298 = vst [vmem:[%s204 + $0x190] sm:$0xff] %v250
        %299 = vst [vmem:[%s204 + $0x198] sm:$0xff] %v251
        %300 = vst [vmem:[%s204 + $0x1a0] sm:$0xff] %v252
        %301 = vst [vmem:[%s204 + $0x1a8] sm:$0xff] %v253
        %302 = vst [vmem:[%s204 + $0x1c0] sm:$0xff] %v254
        %303 = vst [vmem:[%s204 + $0x1c8] sm:$0xff] %v255
        %304 = vst [vmem:[%s204 + $0x1d0] sm:$0xff] %v256
        %305 = vst [vmem:[%s204 + $0x1d8] sm:$0xff] %v257
        %306 = vst [vmem:[%s204 + $0x1e0] sm:$0xff] %v258
        %307 = vst [vmem:[%s204 + $0x1e8] sm:$0xff] %v259
        %v308 = vld [vmem:[#allocation5] sm:$0xff]
        %v309 = vld [vmem:[#allocation5 + $0x8] sm:$0xff]
        %v310 = vld [vmem:[#allocation5 + $0x10] sm:$0xff]
        %v311 = vld [vmem:[#allocation5 + $0x18] sm:$0xff]
        %v312 = vld [vmem:[#allocation5 + $0x20] sm:$0xff]
        %v313 = vld [vmem:[#allocation5 + $0x28] sm:$0xff]
        %v314 = vld [vmem:[#allocation5 + $0x30] sm:$0xff]
        %v315 = vld [vmem:[#allocation5 + $0x38] sm:$0xff]
        %v316 = vld [vmem:[#allocation5 + $0x40] sm:$0xff]
        %v317 = vld [vmem:[#allocation5 + $0x48] sm:$0xff]
        %v318 = vld [vmem:[#allocation5 + $0x50] sm:$0xff]
        %v319 = vld [vmem:[#allocation5 + $0x58] sm:$0xff]
        %v320 = vld [vmem:[#allocation5 + $0x60] sm:$0xff]
        %v321 = vld [vmem:[#allocation5 + $0x68] sm:$0xff]
        %v322 = vld [vmem:[#allocation5 + $0x70] sm:$0xff]
        %v323 = vld [vmem:[#allocation5 + $0x78] sm:$0xff]
        %324 = vst [vmem:[%s204 + $0x30] sm:$0xff] %v308
        %325 = vst [vmem:[%s204 + $0x38] sm:$0xff] %v309
        %326 = vst [vmem:[%s204 + $0x70] sm:$0xff] %v310
        %327 = vst [vmem:[%s204 + $0x78] sm:$0xff] %v311
        %328 = vst [vmem:[%s204 + $0xb0] sm:$0xff] %v312
        %329 = vst [vmem:[%s204 + $0xb8] sm:$0xff] %v313
        %330 = vst [vmem:[%s204 + $0xf0] sm:$0xff] %v314
        %331 = vst [vmem:[%s204 + $0xf8] sm:$0xff] %v315
        %332 = vst [vmem:[%s204 + $0x130] sm:$0xff] %v316
        %333 = vst [vmem:[%s204 + $0x138] sm:$0xff] %v317
        %334 = vst [vmem:[%s204 + $0x170] sm:$0xff] %v318
        %335 = vst [vmem:[%s204 + $0x178] sm:$0xff] %v319
        %336 = vst [vmem:[%s204 + $0x1b0] sm:$0xff] %v320
        %337 = vst [vmem:[%s204 + $0x1b8] sm:$0xff] %v321
        %338 = vst [vmem:[%s204 + $0x1f0] sm:$0xff] %v322
        %339 = vst [vmem:[%s204 + $0x1f8] sm:$0xff] %v323
        %s340 = sand.u32 %s105, 1
        %s341 = scalar_lea.sflag [#allocation4], %s340
        %s342 = sand.u32 %s105, 1
        %s343 = smul.addr %s342, 512
        %s344 = scalar_lea.vmem [#allocation7], %s343
        // Predicated region
        $region37: #{tpu_custom_call.1} parent=27 // pred_check
          %p345 = pneg %p115
        $region38: #{tpu_custom_call.1} parent=27 // pred_check_branch
          %347 = sbr.rel (%p345) target = $region40
        $region39: #{tpu_custom_call.1} parent=27 // pred_region
          #allocation9 [shape = 'u32[6]{0}', space=smem, size = 0x18, scoped, tag = 'DMA stride descriptor']
          %s348 = smul.u32 8, %s23
          %s349 = smul.u32 4, %s25
          %s350 = smul.u32 2, %s24
          %352 = vsyncadd %s341, 0
          %s353 = smul.addr %s349, 2
          %s354 = sadd.s32 %s350, %s353
          %s355 = smul.addr %s348, 16
          %s356 = sadd.s32 %s354, %s355
          %s357 = smul.addr %s356, 8
          %s358 = scalar_lea.hbm %s2, %s357
          %s360 = sshll.u32 1, 14
          %s361 = sxor.u32 4294967295, %s360
          %s364 = sshll.u32 7, 18
          %s365 = sxor.u32 4294967295, %s364
          %s366 = sand.u32 0, %s365
          %s368 = sor.u32 %s366, 0
          %s369 = sshll.u32 %s344, 4
          %s370 = int_to_ptr.vmem [resolvable:$true] %s369
          %s371 = sshll.u32 %s358, 4
          %s372 = int_to_ptr.hbm [resolvable:$true] %s371
          %378 = sst [smem:[#allocation9]] 1024
          %s379 = scalar_lea.smem [#allocation9], 1
          %380 = sst [smem:[%s379]] 2048
          %s381 = scalar_lea.smem [#allocation9], 2
          %382 = sst [smem:[%s381]] 4
          %s383 = scalar_lea.smem [#allocation9], 3
          %384 = sst [smem:[%s383]] 256
          %s385 = scalar_lea.smem [#allocation9], 4
          %386 = sst [smem:[%s385]] 256
          %s387 = scalar_lea.smem [#allocation9], 5
          %388 = sst [smem:[%s387]] 16
          %390 = dma.general %s370, 8192, %s372, %s341, [#allocation8], [#allocation9], %s368, 0
        $region40: #{tpu_custom_call.1} parent=27 // pred_fallthru
          _
      $region28: #{tpu_custom_call.1} parent=5 // pred_fallthru
        _
      %p391 = scmp.le.s32.totalorder 2, %s13
      // Predicated region
      $region41: #{tpu_custom_call.1} parent=5 // pred_check
        %p392 = pneg %p391
      $region42: #{tpu_custom_call.1} parent=5 // pred_check_branch
        %394 = sbr.rel (%p392) target = $region44
      $region43: #{tpu_custom_call.1} parent=5 // pred_region
        %s395 = ssub.s32 %s13, 2
        // Predicated region
        $region45: #{tpu_custom_call.1} parent=43 // pred_check
          %p396 = pneg %p121
        $region46: #{tpu_custom_call.1} parent=43 // pred_check_branch
          %398 = sbr.rel (%p396) target = $region48
        $region47: #{tpu_custom_call.1} parent=43 // pred_region
          %s399 = sand.u32 %s106, 1
          %s400 = scalar_lea.sflag [#allocation4], %s399
          %s401 = sand.u32 %s106, 1
          %s402 = smul.addr %s401, 512
          %s403 = scalar_lea.vmem [#allocation7], %s402
          %405 = dma.done %s400, 8192
        $region48: #{tpu_custom_call.1} parent=43 // pred_fallthru
          _
      $region44: #{tpu_custom_call.1} parent=5 // pred_fallthru
        _
    $region6: #{tpu_custom_call.1} parent=1 // loop_footer
      %s17 = sadd.s32 1, %s13
    $region7: #{tpu_custom_call.1} parent=1 // loop_footer_branch
      %12 = sbr.rel target = $region3
    $region8: #{tpu_custom_call.1} parent=1 // loop_exit
      _
    %406 = vsyncpa [#allocation3], 1
    %s407 = scalar_lea.sflag [#allocation3], 1
    %408 = vsyncpa %s407, 1
    %409 = vsyncpa [#allocation6], 1
    %410 = vsyncpa [#allocation4], 1
    %s411 = scalar_lea.sflag [#allocation4], 1
    %412 = vsyncpa %s411, 1

</llo_original>
